<compile_context>
chip_gen: v7x
topology: tpu7x:2x2x1
jax: 0.10.0
libtpu: 0.0.40
codegen_flags: <defaults>
</compile_context>

<pallas_src>
import jax
import jax.numpy as jnp
from jax.experimental import pallas as pl
from jax.experimental.pallas import tpu as pltpu


def _round_up(x: int, m: int) -> int:
    return ((x + m - 1) // m) * m


def critic_kernel(s_ref, a_ref, w1s_ref, w1a_ref, b1_ref, w2_ref, b2_ref,
                  w3_ref, b3_ref, out_ref):
    """One batch tile: fused concat (split-W1) + 2x (matmul,bias,ReLU) + fc3."""
    # fc1 on the concatenated [state | action] == state @ W1_s + action @ W1_a
    h1 = (jnp.dot(s_ref[...], w1s_ref[...], preferred_element_type=jnp.float32)
          + jnp.dot(a_ref[...], w1a_ref[...], preferred_element_type=jnp.float32)
          + b1_ref[...])
    h1 = jnp.maximum(h1, 0.0)                                      # [TB, 16]

    h2 = jnp.dot(h1, w2_ref[...], preferred_element_type=jnp.float32) + b2_ref[...]
    h2 = jnp.maximum(h2, 0.0)                                      # [TB, 16]

    # fc3 (16 -> 1): VPU multiply + cross-lane reduce instead of a tiny MXU pass.
    q = jnp.sum(h2 * w3_ref[...], axis=-1, keepdims=True) + b3_ref[...]
    out_ref[...] = q.astype(out_ref.dtype)                         # [TB, 1]


def critic_forward(state, action, params, *, tile_b=1024):
    """state: [B, state_dim], action: [B, action_dim] -> q: [B, 1]."""
    w1, b1, w2, b2, w3, b3 = params
    B, S = state.shape
    A = action.shape[1]

    state = state.astype(jnp.float32)
    action = action.astype(jnp.float32)

    # Split fc1's weight so the concat fuses into two matmuls inside the kernel.
    w1_s = w1[:S]                 # [S, 16]
    w1_a = w1[S:]                 # [A, 16]
    w3_row = w3.reshape(1, -1)    # [1, 16] row for the VPU mul + lane reduce

    # Batch tiling: tile of at most `tile_b` rows, batch padded to a multiple.
    TB = min(tile_b, _round_up(B, 8))
    Bp = _round_up(B, TB)
    if Bp != B:
        pad = Bp - B
        state = jnp.pad(state, ((0, pad), (0, 0)))
        action = jnp.pad(action, ((0, pad), (0, 0)))

    grid = (pl.cdiv(Bp, TB),)

    def batch_spec(feat):
        return pl.BlockSpec((TB, feat), lambda i: (i, 0))

    def const_spec(shape):
        return pl.BlockSpec(shape, lambda i: (0, 0))   # resident across steps

    q = pl.pallas_call(
        critic_kernel,
        out_shape=jax.ShapeDtypeStruct((Bp, 1), jnp.float32),
        grid=grid,
        in_specs=[
            batch_spec(S),             # state   [TB, S]
            batch_spec(A),             # action  [TB, A]
            const_spec(w1_s.shape),    # w1_s    [S, 16]
            const_spec(w1_a.shape),    # w1_a    [A, 16]
            const_spec(b1.shape),      # b1      [1, 16]
            const_spec(w2.shape),      # w2      [16, 16]
            const_spec(b2.shape),      # b2      [1, 16]
            const_spec(w3_row.shape),  # w3_row  [1, 16]
            const_spec(b3.shape),      # b3      [1, 1]
        ],
        out_specs=pl.BlockSpec((TB, 1), lambda i: (i, 0)),
        compiler_params=pltpu.CompilerParams(
            dimension_semantics=("parallel",)),        # megacore on v7x
    )(state, action, w1_s, w1_a, b1, w2, b2, w3_row, b3)

    return q[:B]


def init_params(key, state_dim, action_dim):
    """Deterministic init mimicking nn.Linear's U(-1/sqrt(fan_in), 1/sqrt(fan_in))."""
    dims = [(state_dim + action_dim, 16), (16, 16), (16, 1)]
    params = []
    for (fan_in, fan_out) in dims:
        key, kw, kb = jax.random.split(key, 3)
        bound = 1.0 / jnp.sqrt(jnp.float32(fan_in))
        w = jax.random.uniform(kw, (fan_in, fan_out), jnp.float32, -bound, bound)
        b = jax.random.uniform(kb, (1, fan_out), jnp.float32, -bound, bound)
        params += [w, b]
    return tuple(params)


def critic_ref(state, action, params):
    """Pure-JAX reference for correctness checking."""
    sa = jnp.concatenate([state, action], axis=1)
    w1, b1, w2, b2, w3, b3 = params
    h1 = jnp.maximum(sa @ w1 + b1, 0.0)
    h2 = jnp.maximum(h1 @ w2 + b2, 0.0)
    return h2 @ w3 + b3


if __name__ == "__main__":
    batch, state_dim, action_dim = 8, 4, 2

    key = jax.random.PRNGKey(0)
    kp, ks, ka = jax.random.split(key, 3)
    params = init_params(kp, state_dim, action_dim)
    state = jax.random.normal(ks, (batch, state_dim), jnp.float32)
    action = jax.random.normal(ka, (batch, action_dim), jnp.float32)

    critic_jit = jax.jit(critic_forward)
    q = jax.block_until_ready(critic_jit(state, action, params))
    q_ref = critic_ref(state, action, params)

    assert q.shape == (batch, 1), q.shape
    assert jnp.allclose(q, q_ref, atol=1e-5, rtol=1e-5), (q, q_ref)
    print("KERNEL_OK")
</pallas_src>

<mosaic_0001>
module attributes {stable_mosaic.version = 11 : i64} {
  func.func @critic_kernel(%arg0: i32, %arg1: memref<8x4xf32, #tpu.memory_space<vmem>>, %arg2: memref<8x2xf32, #tpu.memory_space<vmem>>, %arg3: memref<4x16xf32, #tpu.memory_space<vmem>>, %arg4: memref<2x16xf32, #tpu.memory_space<vmem>>, %arg5: memref<1x16xf32, #tpu.memory_space<vmem>>, %arg6: memref<16x16xf32, #tpu.memory_space<vmem>>, %arg7: memref<1x16xf32, #tpu.memory_space<vmem>>, %arg8: memref<1x16xf32, #tpu.memory_space<vmem>>, %arg9: memref<1x1xf32, #tpu.memory_space<vmem>>, %arg10: memref<8x1xf32, #tpu.memory_space<vmem>>) attributes {dimension_semantics = [#tpu.dimension_semantics<parallel>], iteration_bounds = array<i64: 1>, scalar_prefetch = 0 : i64, scratch_operands = 0 : i64, tpu.core_type = #tpu.core_type<tc>, window_params = [{transform_indices = @transform_0, window_bounds = array<i64: 8, 4>}, {transform_indices = @transform_1, window_bounds = array<i64: 8, 2>}, {pipeline_mode = #tpu.pipeline_mode<synchronous>, transform_indices = @transform_2, window_bounds = array<i64: 4, 16>}, {pipeline_mode = #tpu.pipeline_mode<synchronous>, transform_indices = @transform_3, window_bounds = array<i64: 2, 16>}, {pipeline_mode = #tpu.pipeline_mode<synchronous>, transform_indices = @transform_4, window_bounds = array<i64: 1, 16>}, {pipeline_mode = #tpu.pipeline_mode<synchronous>, transform_indices = @transform_5, window_bounds = array<i64: 16, 16>}, {pipeline_mode = #tpu.pipeline_mode<synchronous>, transform_indices = @transform_6, window_bounds = array<i64: 1, 16>}, {pipeline_mode = #tpu.pipeline_mode<synchronous>, transform_indices = @transform_7, window_bounds = array<i64: 1, 16>}, {pipeline_mode = #tpu.pipeline_mode<synchronous>, transform_indices = @transform_8, window_bounds = array<i64: 1, 1>}, {transform_indices = @transform_9, window_bounds = array<i64: 8, 1>}]} {
    %c0 = arith.constant 0 : index
    %c0_0 = arith.constant 0 : index
    %0 = vector.load %arg1[%c0, %c0_0] : memref<8x4xf32, #tpu.memory_space<vmem>>, vector<8x4xf32>
    %c0_1 = arith.constant 0 : index
    %c0_2 = arith.constant 0 : index
    %1 = vector.load %arg3[%c0_1, %c0_2] : memref<4x16xf32, #tpu.memory_space<vmem>>, vector<4x16xf32>
    %cst = arith.constant dense<0.000000e+00> : vector<8x16xf32>
    %2 = tpu.matmul %0, %1, %cst {dimension_numbers = #tpu.dot_dimension_numbers<[1], [0], [0], [1], [0, 0, 1, 1], [], []>} : vector<8x4xf32>, vector<4x16xf32>, vector<8x16xf32> -> vector<8x16xf32>
    %c0_3 = arith.constant 0 : index
    %c0_4 = arith.constant 0 : index
    %3 = vector.load %arg2[%c0_3, %c0_4] : memref<8x2xf32, #tpu.memory_space<vmem>>, vector<8x2xf32>
    %c0_5 = arith.constant 0 : index
    %c0_6 = arith.constant 0 : index
    %4 = vector.load %arg4[%c0_5, %c0_6] : memref<2x16xf32, #tpu.memory_space<vmem>>, vector<2x16xf32>
    %cst_7 = arith.constant dense<0.000000e+00> : vector<8x16xf32>
    %5 = tpu.matmul %3, %4, %cst_7 {dimension_numbers = #tpu.dot_dimension_numbers<[1], [0], [0], [1], [0, 0, 1, 1], [], []>} : vector<8x2xf32>, vector<2x16xf32>, vector<8x16xf32> -> vector<8x16xf32>
    %6 = arith.addf %2, %5 : vector<8x16xf32>
    %c0_8 = arith.constant 0 : index
    %c0_9 = arith.constant 0 : index
    %7 = vector.load %arg5[%c0_8, %c0_9] : memref<1x16xf32, #tpu.memory_space<vmem>>, vector<1x16xf32>
    %8 = vector.broadcast %7 : vector<1x16xf32> to vector<8x16xf32>
    %9 = arith.addf %6, %8 : vector<8x16xf32>
    %cst_10 = arith.constant 0.000000e+00 : f32
    %10 = vector.broadcast %cst_10 : f32 to vector<8x16xf32>
    %11 = arith.maximumf %9, %10 : vector<8x16xf32>
    %c0_11 = arith.constant 0 : index
    %c0_12 = arith.constant 0 : index
    %12 = vector.load %arg6[%c0_11, %c0_12] : memref<16x16xf32, #tpu.memory_space<vmem>>, vector<16x16xf32>
    %cst_13 = arith.constant dense<0.000000e+00> : vector<8x16xf32>
    %13 = tpu.matmul %11, %12, %cst_13 {dimension_numbers = #tpu.dot_dimension_numbers<[1], [0], [0], [1], [0, 0, 1, 1], [], []>} : vector<8x16xf32>, vector<16x16xf32>, vector<8x16xf32> -> vector<8x16xf32>
    %c0_14 = arith.constant 0 : index
    %c0_15 = arith.constant 0 : index
    %14 = vector.load %arg7[%c0_14, %c0_15] : memref<1x16xf32, #tpu.memory_space<vmem>>, vector<1x16xf32>
    %15 = vector.broadcast %14 : vector<1x16xf32> to vector<8x16xf32>
    %16 = arith.addf %13, %15 : vector<8x16xf32>
    %cst_16 = arith.constant 0.000000e+00 : f32
    %17 = vector.broadcast %cst_16 : f32 to vector<8x16xf32>
    %18 = arith.maximumf %16, %17 : vector<8x16xf32>
    %c0_17 = arith.constant 0 : index
    %c0_18 = arith.constant 0 : index
    %19 = vector.load %arg8[%c0_17, %c0_18] : memref<1x16xf32, #tpu.memory_space<vmem>>, vector<1x16xf32>
    %20 = vector.broadcast %19 : vector<1x16xf32> to vector<8x16xf32>
    %21 = arith.mulf %18, %20 : vector<8x16xf32>
    %cst_19 = arith.constant dense<0.000000e+00> : vector<8xf32>
    %22 = vector.multi_reduction <add>, %21, %cst_19 [1] : vector<8x16xf32> to vector<8xf32>
    %23 = vector.shape_cast %22 : vector<8xf32> to vector<8x1xf32>
    %c0_20 = arith.constant 0 : index
    %c0_21 = arith.constant 0 : index
    %24 = vector.load %arg9[%c0_20, %c0_21] : memref<1x1xf32, #tpu.memory_space<vmem>>, vector<1x1xf32>
    %25 = vector.broadcast %24 : vector<1x1xf32> to vector<8x1xf32>
    %26 = arith.addf %23, %25 : vector<8x1xf32>
    %c0_22 = arith.constant 0 : index
    %c0_23 = arith.constant 0 : index
    %27 = vector.load %arg10[%c0_22, %c0_23] : memref<8x1xf32, #tpu.memory_space<vmem>>, vector<8x1xf32>
    tpu.vector_store %arg10[%c0_22, %c0_23], %26 {strides = array<i32>} : memref<8x1xf32, #tpu.memory_space<vmem>>, vector<8x1xf32>,
    return
  }
  func.func @transform_0(%arg0: i32) -> (i32, i32) {
    %c0_i32 = arith.constant 0 : i32
    %c0_i32_0 = arith.constant 0 : i32
    return %arg0, %c0_i32 : i32, i32
  }
  func.func @transform_1(%arg0: i32) -> (i32, i32) {
    %c0_i32 = arith.constant 0 : i32
    %c0_i32_0 = arith.constant 0 : i32
    return %arg0, %c0_i32 : i32, i32
  }
  func.func @transform_2(%arg0: i32) -> (i32, i32) {
    %c0_i32 = arith.constant 0 : i32
    %c0_i32_0 = arith.constant 0 : i32
    %c0_i32_1 = arith.constant 0 : i32
    return %c0_i32, %c0_i32_0 : i32, i32
  }
  func.func @transform_3(%arg0: i32) -> (i32, i32) {
    %c0_i32 = arith.constant 0 : i32
    %c0_i32_0 = arith.constant 0 : i32
    %c0_i32_1 = arith.constant 0 : i32
    return %c0_i32, %c0_i32_0 : i32, i32
  }
  func.func @transform_4(%arg0: i32) -> (i32, i32) {
    %c0_i32 = arith.constant 0 : i32
    %c0_i32_0 = arith.constant 0 : i32
    %c0_i32_1 = arith.constant 0 : i32
    return %c0_i32, %c0_i32_0 : i32, i32
  }
  func.func @transform_5(%arg0: i32) -> (i32, i32) {
    %c0_i32 = arith.constant 0 : i32
    %c0_i32_0 = arith.constant 0 : i32
    %c0_i32_1 = arith.constant 0 : i32
    return %c0_i32, %c0_i32_0 : i32, i32
  }
  func.func @transform_6(%arg0: i32) -> (i32, i32) {
    %c0_i32 = arith.constant 0 : i32
    %c0_i32_0 = arith.constant 0 : i32
    %c0_i32_1 = arith.constant 0 : i32
    return %c0_i32, %c0_i32_0 : i32, i32
  }
  func.func @transform_7(%arg0: i32) -> (i32, i32) {
    %c0_i32 = arith.constant 0 : i32
    %c0_i32_0 = arith.constant 0 : i32
    %c0_i32_1 = arith.constant 0 : i32
    return %c0_i32, %c0_i32_0 : i32, i32
  }
  func.func @transform_8(%arg0: i32) -> (i32, i32) {
    %c0_i32 = arith.constant 0 : i32
    %c0_i32_0 = arith.constant 0 : i32
    %c0_i32_1 = arith.constant 0 : i32
    return %c0_i32, %c0_i32_0 : i32, i32
  }
  func.func @transform_9(%arg0: i32) -> (i32, i32) {
    %c0_i32 = arith.constant 0 : i32
    %c0_i32_0 = arith.constant 0 : i32
    return %arg0, %c0_i32 : i32, i32
  }
}

</mosaic_0001>

<llo_original>
// kernel: critic_forward.1
$region0: #{critic_forward.1}
  #allocation0 [shape = 'u32[]', space=smem, size = 0x4, offset = 0x4, fixed_abs, tag = 'smem constant byte address 0x4 - core index']
  #allocation1 [shape = 'u32[144,128]{1,0:T(1,128)}', space=vmem, size = 0x12000, scoped, tag = 'internal scratch']
  #allocation2 [shape = 'f32[1,1]{1,0:T(1,128)S(1)}', space=vmem, size = 0x200, scoped, tag = 'scoped memory for critic_forward.1']
  %s0 = inlined_call_operand.vmem [shape: f32[8,4], index: 0, kind: input, shape index: {}]
  %s1 = inlined_call_operand.vmem [shape: f32[8,2], index: 1, kind: input, shape index: {}]
  %s2 = inlined_call_operand.vmem [shape: f32[4,16], index: 2, kind: input, shape index: {}]
  %s3 = inlined_call_operand.vmem [shape: f32[2,16], index: 3, kind: input, shape index: {}]
  %s4 = inlined_call_operand.vmem [shape: f32[1,16], index: 4, kind: input, shape index: {}]
  %s5 = inlined_call_operand.vmem [shape: f32[16,16], index: 5, kind: input, shape index: {}]
  %s6 = inlined_call_operand.vmem [shape: f32[1,16], index: 6, kind: input, shape index: {}]
  %s7 = inlined_call_operand.vmem [shape: f32[1,16], index: 7, kind: input, shape index: {}]
  %s8 = inlined_call_operand.<no memory space> [shape: f32[1,1], index: 8, kind: input, shape index: {}]
  %s9 = inlined_call_operand.vmem [shape: f32[8,1], index: 9, kind: output, shape index: {}]
  %s10 = sld [smem:[#allocation0]]
  $region46: #{critic_forward.1} parent=0
    _
  %s12 = ssub.s32 1, %s10
  %s13 = scalar_select 0, %s12, %s10
  %v14 = vstv %s8
  %15 = vst [vmem:[#allocation2] sm:$0x1] %v14
  // Predicated region
  $region2: #{critic_forward.1} parent=0 // pred_check
    _
  $region3: #{critic_forward.1} parent=0 // pred_check_branch
    %17 = sbr.rel (0) target = $region5
  $region4: #{critic_forward.1} parent=0 // pred_region
    _
  $region5: #{critic_forward.1} parent=0 // pred_fallthru
    _
  // Predicated region
  $region6: #{critic_forward.1} parent=0 // pred_check
    _
  $region7: #{critic_forward.1} parent=0 // pred_check_branch
    %19 = sbr.rel (0) target = $region9
  $region8: #{critic_forward.1} parent=0 // pred_region
    _
  $region9: #{critic_forward.1} parent=0 // pred_fallthru
    _
  // Predicated region
  $region10: #{critic_forward.1} parent=0 // pred_check
    _
  $region11: #{critic_forward.1} parent=0 // pred_check_branch
    %21 = sbr.rel (0) target = $region13
  $region12: #{critic_forward.1} parent=0 // pred_region
    _
  $region13: #{critic_forward.1} parent=0 // pred_fallthru
    _
  // Predicated region
  $region14: #{critic_forward.1} parent=0 // pred_check
    _
  $region15: #{critic_forward.1} parent=0 // pred_check_branch
    %23 = sbr.rel (0) target = $region17
  $region16: #{critic_forward.1} parent=0 // pred_region
    _
  $region17: #{critic_forward.1} parent=0 // pred_fallthru
    _
  // Predicated region
  $region18: #{critic_forward.1} parent=0 // pred_check
    _
  $region19: #{critic_forward.1} parent=0 // pred_check_branch
    %25 = sbr.rel (0) target = $region21
  $region20: #{critic_forward.1} parent=0 // pred_region
    _
  $region21: #{critic_forward.1} parent=0 // pred_fallthru
    _
  // Predicated region
  $region22: #{critic_forward.1} parent=0 // pred_check
    _
  $region23: #{critic_forward.1} parent=0 // pred_check_branch
    %27 = sbr.rel (0) target = $region25
  $region24: #{critic_forward.1} parent=0 // pred_region
    _
  $region25: #{critic_forward.1} parent=0 // pred_fallthru
    _
  // Predicated region
  $region26: #{critic_forward.1} parent=0 // pred_check
    _
  $region27: #{critic_forward.1} parent=0 // pred_check_branch
    %29 = sbr.rel (0) target = $region29
  $region28: #{critic_forward.1} parent=0 // pred_region
    _
  $region29: #{critic_forward.1} parent=0 // pred_fallthru
    _
  // Predicated region
  $region30: #{critic_forward.1} parent=0 // pred_check
    _
  $region31: #{critic_forward.1} parent=0 // pred_check_branch
    %31 = sbr.rel (0) target = $region33
  $region32: #{critic_forward.1} parent=0 // pred_region
    _
  $region33: #{critic_forward.1} parent=0 // pred_fallthru
    _
  // Predicated region
  $region34: #{critic_forward.1} parent=0 // pred_check
    _
  $region35: #{critic_forward.1} parent=0 // pred_check_branch
    %33 = sbr.rel (0) target = $region37
  $region36: #{critic_forward.1} parent=0 // pred_region
    _
  $region37: #{critic_forward.1} parent=0 // pred_fallthru
    _
  %v34 = vld [vmem:[%s0] sm:$0xff]
  %v35 = vld [vmem:[%s2] sm:$0xf]
  %v36 = vld [vmem:[%s1] sm:$0xff]
  %v37 = vld [vmem:[%s3] sm:$0x3]
  %vm38 = vcmask 15360
  %v40 = vsel %vm38, %v36, 0
  %vm42 = vcmask 1041408
  %v44 = vsel %vm42, %v37, 0
  %46 = vmatprep.subr.mxu0 0.0
  %47 = vmatpush1.msra.mxu0 %v44
  %48 = vmatprep.subr.mxu0 0.0
  %49 = vmatpush1.msra.mxu0 0.0
  %50 = vmatprep.subr.mxu0 0.0
  %51 = vmatpush1.msra.mxu0 0.0
  %52 = vmatprep.subr.mxu0 0.0
  %53 = vmatpush1.msra.mxu0 0.0
  %54 = vmatprep.subr.mxu0 0.0
  %55 = vmatpush1.msra.mxu0 0.0
  %56 = vmatprep.subr.mxu0 0.0
  %57 = vmatpush1.msra.mxu0 0.0
  %58 = vmatprep.subr.mxu0 0.0
  %59 = vmatpush1.msra.mxu0 0.0
  %60 = vmatprep.subr.mxu0 0.0
  %61 = vmatpush1.msra.mxu0 0.0
  %62 = vmatprep.subr.mxu0 0.0
  %63 = vmatpush1.msra.mxu0 0.0
  %64 = vmatprep.subr.mxu0 0.0
  %65 = vmatpush1.msra.mxu0 0.0
  %66 = vmatprep.subr.mxu0 0.0
  %67 = vmatpush1.msra.mxu0 0.0
  %68 = vmatprep.subr.mxu0 0.0
  %69 = vmatpush1.msra.mxu0 0.0
  %70 = vmatprep.subr.mxu0 0.0
  %71 = vmatpush1.msra.mxu0 0.0
  %72 = vmatprep.subr.mxu0 0.0
  %73 = vmatpush1.msra.mxu0 0.0
  %74 = vmatprep.subr.mxu0 0.0
  %75 = vmatpush1.msra.mxu0 0.0
  %76 = vmatprep.subr.mxu0 0.0
  %77 = vmatpush1.msra.mxu0 0.0
  %78 = vmatprep.subr.mxu0 0.0
  %79 = vmatpush1.msra.mxu0 0.0
  %80 = vmatprep.subr.mxu0 0.0
  %81 = vmatpush1.msra.mxu0 0.0
  %82 = vmatprep.subr.mxu0 0.0
  %83 = vmatpush1.msra.mxu0 0.0
  %84 = vmatprep.subr.mxu0 0.0
  %85 = vmatpush1.msra.mxu0 0.0
  %86 = vmatprep.subr.mxu0 0.0
  %87 = vmatpush1.msra.mxu0 0.0
  %88 = vmatprep.subr.mxu0 0.0
  %89 = vmatpush1.msra.mxu0 0.0
  %90 = vmatprep.subr.mxu0 0.0
  %91 = vmatpush1.msra.mxu0 0.0
  %92 = vmatprep.subr.mxu0 0.0
  %93 = vmatpush1.msra.mxu0 0.0
  %94 = vmatprep.subr.mxu0 0.0
  %95 = vmatpush1.msra.mxu0 0.0
  %96 = vmatprep.subr.mxu0 0.0
  %97 = vmatpush1.msra.mxu0 0.0
  %98 = vmatprep.subr.mxu0 0.0
  %99 = vmatpush1.msra.mxu0 0.0
  %100 = vmatprep.subr.mxu0 0.0
  %101 = vmatpush1.msra.mxu0 0.0
  %102 = vmatprep.subr.mxu0 0.0
  %103 = vmatpush1.msra.mxu0 0.0
  %104 = vmatprep.subr.mxu0 0.0
  %105 = vmatpush1.msra.mxu0 0.0
  %106 = vmatprep.subr.mxu0 0.0
  %107 = vmatpush1.msra.mxu0 0.0
  %108 = vmatprep.subr.mxu0 0.0
  %109 = vmatpush1.msra.mxu0 0.0
  %110 = vmatprep.mubr.f32.mxu0 0.0
  %111 = vmatmul.mubr.f32.gmra.mrb[0].mxu0 %v40
  %v112 = vpop.f32.mrb[0].mxu0
  %v113 = vadd.f32 0.0, %v112
  %v114 = vpop.f32.mrb[0].mxu0
  %115 = vdwg.mxu0
  %vm116 = vcmask 31744
  %v118 = vsel %vm116, %v34, 0
  %vm120 = vcmask 1043456
  %v122 = vsel %vm120, %v35, 0
  %124 = vmatprep.subr.mxu0 0.0
  %125 = vmatpush1.msra.mxu0 %v122
  %126 = vmatprep.subr.mxu0 0.0
  %127 = vmatpush1.msra.mxu0 0.0
  %128 = vmatprep.subr.mxu0 0.0
  %129 = vmatpush1.msra.mxu0 0.0
  %130 = vmatprep.subr.mxu0 0.0
  %131 = vmatpush1.msra.mxu0 0.0
  %132 = vmatprep.subr.mxu0 0.0
  %133 = vmatpush1.msra.mxu0 0.0
  %134 = vmatprep.subr.mxu0 0.0
  %135 = vmatpush1.msra.mxu0 0.0
  %136 = vmatprep.subr.mxu0 0.0
  %137 = vmatpush1.msra.mxu0 0.0
  %138 = vmatprep.subr.mxu0 0.0
  %139 = vmatpush1.msra.mxu0 0.0
  %140 = vmatprep.subr.mxu0 0.0
  %141 = vmatpush1.msra.mxu0 0.0
  %142 = vmatprep.subr.mxu0 0.0
  %143 = vmatpush1.msra.mxu0 0.0
  %144 = vmatprep.subr.mxu0 0.0
  %145 = vmatpush1.msra.mxu0 0.0
  %146 = vmatprep.subr.mxu0 0.0
  %147 = vmatpush1.msra.mxu0 0.0
  %148 = vmatprep.subr.mxu0 0.0
  %149 = vmatpush1.msra.mxu0 0.0
  %150 = vmatprep.subr.mxu0 0.0
  %151 = vmatpush1.msra.mxu0 0.0
  %152 = vmatprep.subr.mxu0 0.0
  %153 = vmatpush1.msra.mxu0 0.0
  %154 = vmatprep.subr.mxu0 0.0
  %155 = vmatpush1.msra.mxu0 0.0
  %156 = vmatprep.subr.mxu0 0.0
  %157 = vmatpush1.msra.mxu0 0.0
  %158 = vmatprep.subr.mxu0 0.0
  %159 = vmatpush1.msra.mxu0 0.0
  %160 = vmatprep.subr.mxu0 0.0
  %161 = vmatpush1.msra.mxu0 0.0
  %162 = vmatprep.subr.mxu0 0.0
  %163 = vmatpush1.msra.mxu0 0.0
  %164 = vmatprep.subr.mxu0 0.0
  %165 = vmatpush1.msra.mxu0 0.0
  %166 = vmatprep.subr.mxu0 0.0
  %167 = vmatpush1.msra.mxu0 0.0
  %168 = vmatprep.subr.mxu0 0.0
  %169 = vmatpush1.msra.mxu0 0.0
  %170 = vmatprep.subr.mxu0 0.0
  %171 = vmatpush1.msra.mxu0 0.0
  %172 = vmatprep.subr.mxu0 0.0
  %173 = vmatpush1.msra.mxu0 0.0
  %174 = vmatprep.subr.mxu0 0.0
  %175 = vmatpush1.msra.mxu0 0.0
  %176 = vmatprep.subr.mxu0 0.0
  %177 = vmatpush1.msra.mxu0 0.0
  %178 = vmatprep.subr.mxu0 0.0
  %179 = vmatpush1.msra.mxu0 0.0
  %180 = vmatprep.subr.mxu0 0.0
  %181 = vmatpush1.msra.mxu0 0.0
  %182 = vmatprep.subr.mxu0 0.0
  %183 = vmatpush1.msra.mxu0 0.0
  %184 = vmatprep.subr.mxu0 0.0
  %185 = vmatpush1.msra.mxu0 0.0
  %186 = vmatprep.subr.mxu0 0.0
  %187 = vmatpush1.msra.mxu0 0.0
  %188 = vmatprep.mubr.f32.mxu0 0.0
  %189 = vmatmul.mubr.f32.gmra.mrb[0].mxu0 %v118
  %v190 = vpop.f32.mrb[0].mxu0
  %v191 = vadd.f32 %v113, %v190
  %v192 = vpop.f32.mrb[0].mxu0
  %193 = vdwg.mxu0
  %v194 = vld [vmem:[%s4] sm:$0x1]
  %v196 = vlaneseq
  %v197 = vshrl.u32 %v196, 7
  %v198 = vsub.s32 0, %v197
  %v199 = vrot.slane %v194, %v198
  %v201 = vadd.f32 %v191, %v199
  %v202 = vmax.f32 %v201, 0.0
  %v203 = vld [vmem:[%s5] sm:$0xff]
  %v204 = vld [vmem:[%s5 + $0x8] sm:$0xff]
  %v205 = vld [vmem:[%s6] sm:$0x1]
  %v207 = vlaneseq
  %v208 = vshrl.u32 %v207, 7
  %v209 = vsub.s32 0, %v208
  %v210 = vrot.slane %v205, %v209
  %vm212 = vcmask 130048
  %v214 = vsel %vm212, %v202, 0
  %216 = vmatprep.subr.mxu0 0.0
  %217 = vmatpush1.msra.mxu0 %v203
  %218 = vmatprep.subr.mxu0 0.0
  %219 = vmatpush1.msra.mxu0 %v204
  %220 = vmatprep.subr.mxu0 0.0
  %221 = vmatpush1.msra.mxu0 0.0
  %222 = vmatprep.subr.mxu0 0.0
  %223 = vmatpush1.msra.mxu0 0.0
  %224 = vmatprep.subr.mxu0 0.0
  %225 = vmatpush1.msra.mxu0 0.0
  %226 = vmatprep.subr.mxu0 0.0
  %227 = vmatpush1.msra.mxu0 0.0
  %228 = vmatprep.subr.mxu0 0.0
  %229 = vmatpush1.msra.mxu0 0.0
  %230 = vmatprep.subr.mxu0 0.0
  %231 = vmatpush1.msra.mxu0 0.0
  %232 = vmatprep.subr.mxu0 0.0
  %233 = vmatpush1.msra.mxu0 0.0
  %234 = vmatprep.subr.mxu0 0.0
  %235 = vmatpush1.msra.mxu0 0.0
  %236 = vmatprep.subr.mxu0 0.0
  %237 = vmatpush1.msra.mxu0 0.0
  %238 = vmatprep.subr.mxu0 0.0
  %239 = vmatpush1.msra.mxu0 0.0
  %240 = vmatprep.subr.mxu0 0.0
  %241 = vmatpush1.msra.mxu0 0.0
  %242 = vmatprep.subr.mxu0 0.0
  %243 = vmatpush1.msra.mxu0 0.0
  %244 = vmatprep.subr.mxu0 0.0
  %245 = vmatpush1.msra.mxu0 0.0
  %246 = vmatprep.subr.mxu0 0.0
  %247 = vmatpush1.msra.mxu0 0.0
  %248 = vmatprep.subr.mxu0 0.0
  %249 = vmatpush1.msra.mxu0 0.0
  %250 = vmatprep.subr.mxu0 0.0
  %251 = vmatpush1.msra.mxu0 0.0
  %252 = vmatprep.subr.mxu0 0.0
  %253 = vmatpush1.msra.mxu0 0.0
  %254 = vmatprep.subr.mxu0 0.0
  %255 = vmatpush1.msra.mxu0 0.0
  %256 = vmatprep.subr.mxu0 0.0
  %257 = vmatpush1.msra.mxu0 0.0
  %258 = vmatprep.subr.mxu0 0.0
  %259 = vmatpush1.msra.mxu0 0.0
  %260 = vmatprep.subr.mxu0 0.0
  %261 = vmatpush1.msra.mxu0 0.0
  %262 = vmatprep.subr.mxu0 0.0
  %263 = vmatpush1.msra.mxu0 0.0
  %264 = vmatprep.subr.mxu0 0.0
  %265 = vmatpush1.msra.mxu0 0.0
  %266 = vmatprep.subr.mxu0 0.0
  %267 = vmatpush1.msra.mxu0 0.0
  %268 = vmatprep.subr.mxu0 0.0
  %269 = vmatpush1.msra.mxu0 0.0
  %270 = vmatprep.subr.mxu0 0.0
  %271 = vmatpush1.msra.mxu0 0.0
  %272 = vmatprep.subr.mxu0 0.0
  %273 = vmatpush1.msra.mxu0 0.0
  %274 = vmatprep.subr.mxu0 0.0
  %275 = vmatpush1.msra.mxu0 0.0
  %276 = vmatprep.subr.mxu0 0.0
  %277 = vmatpush1.msra.mxu0 0.0
  %278 = vmatprep.subr.mxu0 0.0
  %279 = vmatpush1.msra.mxu0 0.0
  %280 = vmatprep.mubr.f32.mxu0 0.0
  %281 = vmatmul.mubr.f32.gmra.mrb[0].mxu0 %v214
  %v282 = vpop.f32.mrb[0].mxu0
  %v283 = vadd.f32 %v210, %v282
  %v284 = vpop.f32.mrb[0].mxu0
  %285 = vdwg.mxu0
  %v286 = vmax.f32 %v283, 0.0
  %v287 = vld [vmem:[%s7] sm:$0x1]
  %v289 = vlaneseq
  %v290 = vshrl.u32 %v289, 7
  %v291 = vsub.s32 0, %v290
  %v292 = vrot.slane %v287, %v291
  %v294 = vmul.f32 %v286, %v292
  %v295 = vsel %vm212, %v294, 0.0
  %296 = vadd.xlane.f32.xlu0 %v295
  %v297 = vpop.xlane.xlu0 %296
  %v298 = vld [vmem:[#allocation2] sm:$0x1]
  %v300 = vlaneseq
  %v301 = vshrl.u32 %v300, 7
  %v302 = vsub.s32 0, %v301
  %v303 = vrot.slane %v298, %v302
  %v305 = vadd.f32 %v297, %v303
  %vm306 = vcmask 7168
  %307 = vst.msk [vmem:[%s9] sm:$0xff] %vm306, %v305
  // Predicated region
  $region38: #{critic_forward.1} parent=0 // pred_check
    _
  $region39: #{critic_forward.1} parent=0 // pred_check_branch
    %309 = sbr.rel (0) target = $region41
  $region40: #{critic_forward.1} parent=0 // pred_region
    _
  $region41: #{critic_forward.1} parent=0 // pred_fallthru
    _
  // Predicated region
  $region42: #{critic_forward.1} parent=0 // pred_check
    _
  $region43: #{critic_forward.1} parent=0 // pred_check_branch
    %311 = sbr.rel (0) target = $region45
  $region44: #{critic_forward.1} parent=0 // pred_region
    _
  $region45: #{critic_forward.1} parent=0 // pred_fallthru
    _

</llo_original>
